<compile_context>
chip_gen: v5e
topology: v5e:2x2
jax: 0.10.0
libtpu: 0.0.40
codegen_flags: <defaults>
</compile_context>

<pallas_src>
import jax
import jax.numpy as jnp
from jax.experimental import pallas as pl
from jax.experimental.pallas import tpu as pltpu

LANE = 128  # TPU lane width


def _round_up(x, m):
    return ((x + m - 1) // m) * m


def mlp_kernel(xt_ref, w1_ref, b1_ref, w2_ref, b2_ref, o_ref):
    # xt : (in, Btile)      -- batch on lanes
    # w1 : (hidden, in)     -- torch Linear.weight layout
    # b1 : (hidden, 1)
    # w2 : (hidden, 1)      -- linear2.weight transposed to a column
    # b2 : (1,) scalar in SMEM
    # o  : (1, Btile)       -- lane-dense output row

    # Layer 1 on the MXU: (hidden, in) @ (in, Btile) -> (hidden, Btile), f32 acc.
    ht = jnp.dot(w1_ref[...], xt_ref[...], preferred_element_type=jnp.float32)
    # Bias + ReLU on the VPU (kept in f32 vregs — important on v5e).
    ht = jnp.maximum(ht + b1_ref[...], 0.0)

    # Layer 2 (hidden -> 1) as VPU multiply + cross-sublane reduce instead of an
    # N=1 MXU matmul (which would waste >99% of the systolic array).
    z = jnp.sum(ht * w2_ref[...], axis=0, keepdims=True)        # (1, Btile)

    # Sigmoid on the EUP; b2 read as a scalar from SMEM.
    o_ref[...] = jax.nn.sigmoid(z + b2_ref[0])


def neural_net_forward(x, w1, b1, w2, b2, *, batch_tile=None):
    """Forward pass of NeuralNet.

    x  : (B, input_size) float32
    w1 : (hidden_size, input_size)   (torch linear1.weight layout)
    b1 : (hidden_size,)
    w2 : (hidden_size,)              (torch linear2.weight squeezed)
    b2 : (1,)
    returns (B, 1) float32
    """
    B, in_size = x.shape
    hidden = w1.shape[0]
    assert w1.shape == (hidden, in_size)

    # Lane-aligned batch tiling: one grid step for small B; 1024-wide tiles
    # (multiple of 128 lanes) for large B so output stores stay unmasked.
    if batch_tile is None:
        batch_tile = min(_round_up(B, LANE), 1024)
    else:
        batch_tile = _round_up(batch_tile, LANE)
    Bp = _round_up(B, batch_tile)
    grid = (Bp // batch_tile,)

    # Transposed orientation: batch mapped to lanes. Padding columns are zeros
    # and are sliced off after the call (layout plumbing, free in the wrapper).
    xt = x.T                                   # (in, B)
    if Bp != B:
        xt = jnp.pad(xt, ((0, 0), (0, Bp - B)))

    b1c = b1.reshape(hidden, 1).astype(jnp.float32)
    w2c = w2.reshape(hidden, 1).astype(jnp.float32)
    b2s = jnp.reshape(b2, (1,)).astype(jnp.float32)

    # NOTE: w1 is kept VMEM-resident across the grid. For very large
    # input_size/hidden (w1 approaching the v7x 64 MiB VMEM budget) the K axis
    # should additionally be tiled with an f32 accumulator — not needed here.
    cost = pl.CostEstimate(
        flops=int(2 * Bp * in_size * hidden + 3 * Bp * hidden + 2 * Bp),
        transcendentals=int(Bp),
        bytes_accessed=int(4 * (in_size * Bp + hidden * in_size
                                + 2 * hidden + 1 + Bp)),
    )

    out_t = pl.pallas_call(
        mlp_kernel,
        out_shape=jax.ShapeDtypeStruct((1, Bp), jnp.float32),
        grid_spec=pl.GridSpec(
            grid=grid,
            in_specs=[
                pl.BlockSpec((in_size, batch_tile), lambda i: (0, i)),   # x^T tile
                pl.BlockSpec((hidden, in_size), lambda i: (0, 0)),       # w1 (resident)
                pl.BlockSpec((hidden, 1), lambda i: (0, 0)),             # b1 column
                pl.BlockSpec((hidden, 1), lambda i: (0, 0)),             # w2 column
                pl.BlockSpec(memory_space=pltpu.MemorySpace.SMEM),       # b2 scalar
            ],
            out_specs=pl.BlockSpec((1, batch_tile), lambda i: (0, i)),
        ),
        compiler_params=pltpu.CompilerParams(
            dimension_semantics=("parallel",),   # batch tiles are independent (v7x: 2 TCs)
        ),
        cost_estimate=cost,
    )(xt, w1, b1c, w2c, b2s)

    return out_t[0, :B].reshape(B, 1)


if __name__ == "__main__":
    # Small shapes consistent with the module: batch=16, input_size=16, hidden=32
    batch, input_size, hidden_size = 16, 16, 32

    key = jax.random.PRNGKey(0)
    kx, kw1, kb1, kw2, kb2 = jax.random.split(key, 5)

    x = jax.random.normal(kx, (batch, input_size), dtype=jnp.float32)

    # Deterministic synthetic parameters in torch-native layouts.
    w1 = jax.random.normal(kw1, (hidden_size, input_size), dtype=jnp.float32) * 0.1
    b1 = jax.random.normal(kb1, (hidden_size,), dtype=jnp.float32) * 0.1
    w2 = jax.random.normal(kw2, (hidden_size,), dtype=jnp.float32) * 0.1
    b2 = jax.random.normal(kb2, (1,), dtype=jnp.float32) * 0.1

    out = neural_net_forward(x, w1, b1, w2, b2)
    jax.block_until_ready(out)

    # Reference in plain JAX (same semantics as the torch forward).
    ref = jax.nn.sigmoid(jnp.maximum(x @ w1.T + b1, 0.0) @ w2.reshape(-1, 1) + b2)
    assert out.shape == (batch, 1)
    assert jnp.allclose(out, ref, atol=1e-5), "mismatch vs reference"

    print("KERNEL_OK")
</pallas_src>

<mosaic_0001>
module attributes {stable_mosaic.version = 11 : i64} {
  func.func @mlp_kernel(%arg0: i32, %arg1: memref<16x128xf32, #tpu.memory_space<vmem>>, %arg2: memref<32x16xf32, #tpu.memory_space<vmem>>, %arg3: memref<32x1xf32, #tpu.memory_space<vmem>>, %arg4: memref<32x1xf32, #tpu.memory_space<vmem>>, %arg5: memref<1xf32, #tpu.memory_space<smem>>, %arg6: memref<1x128xf32, #tpu.memory_space<vmem>>) attributes {dimension_semantics = [#tpu.dimension_semantics<parallel>], iteration_bounds = array<i64: 1>, scalar_prefetch = 0 : i64, scratch_operands = 0 : i64, tpu.core_type = #tpu.core_type<tc>, window_params = [{transform_indices = @transform_0, window_bounds = array<i64: 16, 128>}, {pipeline_mode = #tpu.pipeline_mode<synchronous>, transform_indices = @transform_1, window_bounds = array<i64: 32, 16>}, {pipeline_mode = #tpu.pipeline_mode<synchronous>, transform_indices = @transform_2, window_bounds = array<i64: 32, 1>}, {pipeline_mode = #tpu.pipeline_mode<synchronous>, transform_indices = @transform_3, window_bounds = array<i64: 32, 1>}, {transform_indices = @transform_4, window_bounds = array<i64: 1>}, {transform_indices = @transform_5, window_bounds = array<i64: 1, 128>}]} {
    %c0 = arith.constant 0 : index
    %c0_0 = arith.constant 0 : index
    %0 = vector.load %arg2[%c0, %c0_0] : memref<32x16xf32, #tpu.memory_space<vmem>>, vector<32x16xf32>
    %c0_1 = arith.constant 0 : index
    %c0_2 = arith.constant 0 : index
    %1 = vector.load %arg1[%c0_1, %c0_2] : memref<16x128xf32, #tpu.memory_space<vmem>>, vector<16x128xf32>
    %cst = arith.constant dense<0.000000e+00> : vector<32x128xf32>
    %2 = tpu.matmul %0, %1, %cst {dimension_numbers = #tpu.dot_dimension_numbers<[1], [0], [0], [1], [0, 0, 1, 1], [], []>} : vector<32x16xf32>, vector<16x128xf32>, vector<32x128xf32> -> vector<32x128xf32>
    %c0_3 = arith.constant 0 : index
    %c0_4 = arith.constant 0 : index
    %3 = vector.load %arg3[%c0_3, %c0_4] : memref<32x1xf32, #tpu.memory_space<vmem>>, vector<32x1xf32>
    %4 = vector.broadcast %3 : vector<32x1xf32> to vector<32x128xf32>
    %5 = arith.addf %2, %4 : vector<32x128xf32>
    %cst_5 = arith.constant 0.000000e+00 : f32
    %6 = vector.broadcast %cst_5 : f32 to vector<32x128xf32>
    %7 = arith.maximumf %5, %6 : vector<32x128xf32>
    %c0_6 = arith.constant 0 : index
    %c0_7 = arith.constant 0 : index
    %8 = vector.load %arg4[%c0_6, %c0_7] : memref<32x1xf32, #tpu.memory_space<vmem>>, vector<32x1xf32>
    %9 = vector.broadcast %8 : vector<32x1xf32> to vector<32x128xf32>
    %10 = arith.mulf %7, %9 : vector<32x128xf32>
    %cst_8 = arith.constant dense<0.000000e+00> : vector<128xf32>
    %11 = vector.multi_reduction <add>, %10, %cst_8 [0] : vector<32x128xf32> to vector<128xf32>
    %12 = vector.shape_cast %11 : vector<128xf32> to vector<1x128xf32>
    %c0_9 = arith.constant 0 : index
    %13 = memref.load %arg5[%c0_9] : memref<1xf32, #tpu.memory_space<smem>>
    %14 = vector.broadcast %13 : f32 to vector<1x128xf32>
    %15 = arith.addf %12, %14 : vector<1x128xf32>
    %16 = arith.negf %15 : vector<1x128xf32>
    %17 = math.exp %16 : vector<1x128xf32>
    %cst_10 = arith.constant 1.000000e+00 : f32
    %18 = vector.broadcast %cst_10 : f32 to vector<1x128xf32>
    %19 = arith.addf %18, %17 : vector<1x128xf32>
    %20 = arith.divf %18, %19 : vector<1x128xf32>
    %c0_11 = arith.constant 0 : index
    %c0_12 = arith.constant 0 : index
    %21 = vector.load %arg6[%c0_11, %c0_12] : memref<1x128xf32, #tpu.memory_space<vmem>>, vector<1x128xf32>
    tpu.vector_store %arg6[%c0_11, %c0_12], %20 {strides = array<i32>} : memref<1x128xf32, #tpu.memory_space<vmem>>, vector<1x128xf32>,
    return
  }
  func.func @transform_0(%arg0: i32) -> (i32, i32) {
    %c0_i32 = arith.constant 0 : i32
    %c0_i32_0 = arith.constant 0 : i32
    return %c0_i32, %arg0 : i32, i32
  }
  func.func @transform_1(%arg0: i32) -> (i32, i32) {
    %c0_i32 = arith.constant 0 : i32
    %c0_i32_0 = arith.constant 0 : i32
    %c0_i32_1 = arith.constant 0 : i32
    return %c0_i32, %c0_i32_0 : i32, i32
  }
  func.func @transform_2(%arg0: i32) -> (i32, i32) {
    %c0_i32 = arith.constant 0 : i32
    %c0_i32_0 = arith.constant 0 : i32
    %c0_i32_1 = arith.constant 0 : i32
    return %c0_i32, %c0_i32_0 : i32, i32
  }
  func.func @transform_3(%arg0: i32) -> (i32, i32) {
    %c0_i32 = arith.constant 0 : i32
    %c0_i32_0 = arith.constant 0 : i32
    %c0_i32_1 = arith.constant 0 : i32
    return %c0_i32, %c0_i32_0 : i32, i32
  }
  func.func @transform_4(%arg0: i32) -> i32 {
    %c0_i32 = arith.constant 0 : i32
    %c0_i32_0 = arith.constant 0 : i32
    return %c0_i32 : i32
  }
  func.func @transform_5(%arg0: i32) -> (i32, i32) {
    %c0_i32 = arith.constant 0 : i32
    %c0_i32_0 = arith.constant 0 : i32
    return %c0_i32, %arg0 : i32, i32
  }
}

</mosaic_0001>

<llo_original>
// kernel: tpu_custom_call.1
$region0: #{tpu_custom_call.1}
  #allocation0 [shape = 'u32[]', space=smem, size = 0x4, offset = 0x4, fixed_abs, tag = 'smem constant byte address 0x4 - core index']
  #allocation1 [shape = 'u32[72,128]{1,0:T(1,128)}', space=vmem, size = 0x9000, scoped, tag = 'internal scratch']
  #allocation2 [shape = 'f32[1]{0:T(128)S(6)}', space=smem, size = 0x200, scoped, tag = 'scoped memory for tpu_custom_call.1']
  %s0 = inlined_call_operand.vmem [shape: f32[16,128], index: 0, kind: input, shape index: {}]
  %s1 = inlined_call_operand.vmem [shape: f32[32,16], index: 1, kind: input, shape index: {}]
  %s2 = inlined_call_operand.vmem [shape: f32[32,1], index: 2, kind: input, shape index: {}]
  %s3 = inlined_call_operand.vmem [shape: f32[32,1], index: 3, kind: input, shape index: {}]
  %s4 = inlined_call_operand.<no memory space> [shape: f32[1], index: 4, kind: input, shape index: {}]
  %s5 = inlined_call_operand.hbm [shape: f32[1,128], index: 5, kind: output, shape index: {}]
  %s6 = sld [smem:[#allocation0]]
  $region30: #{tpu_custom_call.1} parent=0
    _
  %s8 = ssub.s32 1, %s6
  %s9 = scalar_select 0, %s8, %s6
  %10 = sst [smem:[#allocation2]] %s4
  $region1: #{tpu_custom_call.1} parent=0
    #allocation3 [shape = 'u8[512]{0}', space=vmem, size = 0x400, scoped, tag = 'output window, operand 0, single buffered']
    #allocation4 [shape = 's32[1]{0}', space=sflag, size = 0x4, scoped, tag = 'scoped memory for tpu_custom_call.1']
    %11 = vsyncpa [#allocation4], 0
    // Predicated region
    $region2: #{tpu_custom_call.1} parent=1 // pred_check
      _
    $region3: #{tpu_custom_call.1} parent=1 // pred_check_branch
      %13 = sbr.rel (0) target = $region5
    $region4: #{tpu_custom_call.1} parent=1 // pred_region
      _
    $region5: #{tpu_custom_call.1} parent=1 // pred_fallthru
      _
    // Predicated region
    $region6: #{tpu_custom_call.1} parent=1 // pred_check
      _
    $region7: #{tpu_custom_call.1} parent=1 // pred_check_branch
      %15 = sbr.rel (0) target = $region9
    $region8: #{tpu_custom_call.1} parent=1 // pred_region
      _
    $region9: #{tpu_custom_call.1} parent=1 // pred_fallthru
      _
    // Predicated region
    $region10: #{tpu_custom_call.1} parent=1 // pred_check
      _
    $region11: #{tpu_custom_call.1} parent=1 // pred_check_branch
      %17 = sbr.rel (0) target = $region13
    $region12: #{tpu_custom_call.1} parent=1 // pred_region
      _
    $region13: #{tpu_custom_call.1} parent=1 // pred_fallthru
      _
    // Predicated region
    $region14: #{tpu_custom_call.1} parent=1 // pred_check
      _
    $region15: #{tpu_custom_call.1} parent=1 // pred_check_branch
      %19 = sbr.rel (0) target = $region17
    $region16: #{tpu_custom_call.1} parent=1 // pred_region
      _
    $region17: #{tpu_custom_call.1} parent=1 // pred_fallthru
      _
    // Predicated region
    $region18: #{tpu_custom_call.1} parent=1 // pred_check
      _
    $region19: #{tpu_custom_call.1} parent=1 // pred_check_branch
      %21 = sbr.rel (0) target = $region21
    $region20: #{tpu_custom_call.1} parent=1 // pred_region
      _
    $region21: #{tpu_custom_call.1} parent=1 // pred_fallthru
      _
    %v22 = vld [vmem:[%s1] sm:$0xff]
    %v23 = vld [vmem:[%s1 + $0x8] sm:$0xff]
    %v24 = vld [vmem:[%s1 + $0x10] sm:$0xff]
    %v25 = vld [vmem:[%s1 + $0x18] sm:$0xff]
    %v26 = vld [vmem:[%s0] sm:$0xff]
    %v27 = vld [vmem:[%s0 + $0x8] sm:$0xff]
    %v28 = vld [vmem:[%s2] sm:$0xff]
    %v29 = vld [vmem:[%s2 + $0x8] sm:$0xff]
    %v30 = vld [vmem:[%s2 + $0x10] sm:$0xff]
    %v31 = vld [vmem:[%s2 + $0x18] sm:$0xff]
    %33 = vset.pattern.permute.xlu0 0
    %34 = vperm.xlu0 %33, %v28
    %v35 = vpop.permute.xlu0 %34
    %38 = vset.pattern.permute.xlu0 0
    %39 = vperm.xlu0 %38, %v29
    %v40 = vpop.permute.xlu0 %39
    %43 = vset.pattern.permute.xlu0 0
    %44 = vperm.xlu0 %43, %v30
    %v45 = vpop.permute.xlu0 %44
    %48 = vset.pattern.permute.xlu0 0
    %49 = vperm.xlu0 %48, %v31
    %v50 = vpop.permute.xlu0 %49
    %vm52 = vcmask 130048
    %v54 = vsel %vm52, %v22, 0
    %v57 = vsel %vm52, %v23, 0
    %v60 = vsel %vm52, %v24, 0
    %v63 = vsel %vm52, %v25, 0
    %65 = vmatpush.msra.mxu0 0.0
    %66 = vmatpush.msra.mxu0 0.0
    %67 = vmatpush.msra.mxu0 0.0
    %68 = vmatpush.msra.mxu0 0.0
    %69 = vmatpush.msra.mxu0 0.0
    %70 = vmatpush.msra.mxu0 0.0
    %71 = vmatpush.msra.mxu0 0.0
    %72 = vmatpush.msra.mxu0 0.0
    %73 = vmatpush.msra.mxu0 0.0
    %74 = vmatpush.msra.mxu0 0.0
    %75 = vmatpush.msra.mxu0 0.0
    %76 = vmatpush.msra.mxu0 0.0
    %77 = vmatpush.msra.mxu0 0.0
    %78 = vmatpush.msra.mxu0 0.0
    %79 = vmatpush.msra.mxu0 %v27
    %80 = vmatpush.msra.mxu0 %v26
    %81 = vmatmul.f32.gmra.mxu0 %v54
    %v82 = vpop.f32.mrf.mxu0
    %v83 = vadd.f32 %v35, %v82
    %84 = vmatmul.f32.gmra.mxu0 %v57
    %v85 = vpop.f32.mrf.mxu0
    %v86 = vadd.f32 %v40, %v85
    %87 = vmatmul.f32.gmra.mxu0 %v60
    %v88 = vpop.f32.mrf.mxu0
    %v89 = vadd.f32 %v45, %v88
    %90 = vmatmul.f32.gmra.mxu0 %v63
    %v91 = vpop.f32.mrf.mxu0
    %v92 = vadd.f32 %v50, %v91
    %93 = vdwg.mxu0
    %v94 = vmax.f32 %v83, 0.0
    %v95 = vmax.f32 %v86, 0.0
    %v96 = vmax.f32 %v89, 0.0
    %v97 = vmax.f32 %v92, 0.0
    %v98 = vld [vmem:[%s3] sm:$0xff]
    %v99 = vld [vmem:[%s3 + $0x8] sm:$0xff]
    %v100 = vld [vmem:[%s3 + $0x10] sm:$0xff]
    %v101 = vld [vmem:[%s3 + $0x18] sm:$0xff]
    %103 = vset.pattern.permute.xlu0 0
    %104 = vperm.xlu0 %103, %v98
    %v105 = vpop.permute.xlu0 %104
    %108 = vset.pattern.permute.xlu0 0
    %109 = vperm.xlu0 %108, %v99
    %v110 = vpop.permute.xlu0 %109
    %113 = vset.pattern.permute.xlu0 0
    %114 = vperm.xlu0 %113, %v100
    %v115 = vpop.permute.xlu0 %114
    %118 = vset.pattern.permute.xlu0 0
    %119 = vperm.xlu0 %118, %v101
    %v120 = vpop.permute.xlu0 %119
    %v122 = vmul.f32 %v94, %v105
    %v123 = vmul.f32 %v95, %v110
    %v124 = vmul.f32 %v96, %v115
    %v125 = vmul.f32 %v97, %v120
    %v126 = vadd.f32 %v122, %v123
    %v127 = vadd.f32 %v126, %v124
    %v128 = vadd.f32 %v127, %v125
    %v129 = vrot.slane %v128, 4
    %v130 = vadd.f32 %v128, %v129
    %v131 = vrot.slane %v130, 2
    %v132 = vadd.f32 %v130, %v131
    %v133 = vrot.slane %v132, 1
    %v134 = vadd.f32 %v132, %v133
    %s135 = sld [smem:[#allocation2]]
    %v136 = vstv %s135
    %v137 = vadd.f32 %v134, %v136
    %v138 = vxor.u32 %v137, 2147483648
    %v139 = vmul.f32 %v138, 1.442695
    %v140 = vpow.pop %v139
    %v141 = vadd.f32 %v140, 1.0
    %v142 = vrcp.pop %v141
    %v143 = vmul.f32 %v141, %v142
    %v144 = vsub.f32 1.0, %v143
    %v145 = vmul.f32 %v142, %v144
    %v146 = vadd.f32 %v142, %v145
    %vm147 = vweird.f32 %v141
    %vm148 = vweird.f32 %v142
    %vm149 = vmor %vm147, %vm148
    %v150 = vsel %vm149, %v142, %v146
    %v151 = vand.u32 2147483647, %v141
    %vm152 = vcmp.eq.f32.partialorder %v151, 8.507059e+37
    %v153 = vand.u32 %v141, 2147483648
    %v154 = vor.u32 1.1754944e-38, %v153
    %v155 = vsel %vm152, %v154, %v150
    %v156 = vmul.f32 1.0, %v155
    %157 = vst [vmem:[#allocation3] sm:$0x1] %v156
    // Predicated region
    $region22: #{tpu_custom_call.1} parent=1 // pred_check
      _
    $region23: #{tpu_custom_call.1} parent=1 // pred_check_branch
      %159 = sbr.rel (0) target = $region25
    $region24: #{tpu_custom_call.1} parent=1 // pred_region
      %161 = vsyncadd [#allocation4], 0
      %s163 = sshll.u32 [#allocation3], 4
      %s164 = int_to_ptr.vmem [resolvable:$true] %s163
      %s165 = sshll.u32 %s5, 4
      %s166 = int_to_ptr.hbm [resolvable:$true] %s165
      %168 = dma.vmem_to_hbm [thread:$0]  %s164, 16, %s166, [#allocation4]
    $region25: #{tpu_custom_call.1} parent=1 // pred_fallthru
      _
    // Predicated region
    $region26: #{tpu_custom_call.1} parent=1 // pred_check
      _
    $region27: #{tpu_custom_call.1} parent=1 // pred_check_branch
      %170 = sbr.rel (0) target = $region29
    $region28: #{tpu_custom_call.1} parent=1 // pred_region
      %172 = dma.done [#allocation4], 16
    $region29: #{tpu_custom_call.1} parent=1 // pred_fallthru
      _
    %173 = vsyncpa [#allocation4], 1

</llo_original>
